<compile_context>
chip_gen: v7x
topology: tpu7x:2x2x1
jax: 0.10.0
libtpu: 0.0.40
codegen_flags: <defaults>
</compile_context>

<pallas_src>
import numpy as np
import jax
import jax.numpy as jnp
from jax import lax
from jax.experimental import pallas as pl
from jax.experimental.pallas import tpu as pltpu

LN_EPS = 1e-5
TOKEN_TILE = 128          # tokens per pooling grid step (one lane width)


def _round_up(x, m):
    return ((x + m - 1) // m) * m


def _bucket(x, lo):
    # power-of-two bucketing (>= lo): caps recompile churn from data-dependent
    # N / W while keeping sublane/lane-friendly shapes.
    return max(lo, pl.next_power_of_2(max(int(x), 1)))


def _erf(x):
    # Abramowitz & Stegun 7.1.26 (|err| < 1.5e-7): exact-erf GELU semantics
    # built from exp/mul/add; the divide goes to the EUP slot via pl.reciprocal.
    p = 0.3275911
    a1, a2, a3, a4, a5 = 0.254829592, -0.284496736, 1.421413741, -1.453152027, 1.061405429
    ax = jnp.abs(x)
    t = pl.reciprocal(1.0 + p * ax, approx=True)
    poly = ((((a5 * t + a4) * t + a3) * t + a2) * t + a1) * t
    y = 1.0 - poly * jnp.exp(-ax * ax)
    return jnp.where(x >= 0, y, -y)


def _gelu_exact(x):
    return 0.5 * x * (1.0 + _erf(x * 0.7071067811865476))


# --------------------------- kernel A1: segment sums ---------------------------
def _make_pool_kernel(token_tile, rows):
    def pool_kernel(wstart_ref, seg_ref, feat_ref, psum_ref):
        n = pl.program_id(0)

        @pl.when(n == 0)
        def _init():
            psum_ref[...] = jnp.zeros_like(psum_ref)

        # Every word owning a token of this tile has an id in
        # [w_start, w_start + rows); w_start is pre-aligned to 8 on the host.
        w_start = pl.multiple_of(wstart_ref[n], 8)
        word_ids = w_start + lax.broadcasted_iota(jnp.int32, (rows, token_tile), 0)
        member = (seg_ref[...] == word_ids).astype(jnp.bfloat16)        # local 0/1 tile
        part = jnp.dot(member, feat_ref[...], preferred_element_type=jnp.float32)
        cur = psum_ref[pl.ds(w_start, rows), :]
        psum_ref[pl.ds(w_start, rows), :] = cur + part

    return pool_kernel


# ---------------------- kernel A2: mean + dense + gelu + LN ---------------------
def _make_transform_kernel(d_real):
    inv_d = 1.0 / float(d_real)

    def transform_kernel(psum_ref, invlen_ref, dw_ref, db_ref, g_ref, b_ref, xn_ref):
        pooled = psum_ref[...] * invlen_ref[...]                        # f32 segment mean
        h = jnp.dot(pooled.astype(jnp.bfloat16), dw_ref[...],
                    preferred_element_type=jnp.float32) + db_ref[...]
        h = _gelu_exact(h)

        d_pad = h.shape[-1]
        # Padded feature columns of h are exactly 0 => the mean needs no mask.
        mean = jnp.sum(h, axis=-1, keepdims=True) * inv_d
        if d_pad == d_real:
            c = h - mean
        else:
            col = lax.broadcasted_iota(jnp.int32, h.shape, 1)
            c = jnp.where(col < d_real, h - mean, 0.0)
        var = jnp.sum(c * c, axis=-1, keepdims=True) * inv_d
        xn_ref[...] = (c * lax.rsqrt(var + LN_EPS) * g_ref[...] + b_ref[...]
                       ).astype(xn_ref.dtype)

    return transform_kernel


# --------------------------- kernel B: vocab projection --------------------------
def _projection_kernel(xn_ref, ow_ref, ob_ref, out_ref):
    acc = jnp.dot(xn_ref[...], ow_ref[...], preferred_element_type=jnp.float32)
    out_ref[...] = (acc + ob_ref[...]).astype(out_ref.dtype)


# ------------------------------- host-side wrappers ------------------------------
def prepare_lm_head_params(params, *, tn=1024, out_dtype=jnp.float32):
    """One-time weight preparation (transpose + pad + bf16 cast).

    Cache the result across forward calls: per-call weight massaging streams
    the full V x D weight through XLA and costs as much HBM traffic as the
    projection itself.
    """
    dense_w = jnp.asarray(params["dense_w"], jnp.float32)
    out_w = jnp.asarray(params["out_w"], jnp.float32)
    D = dense_w.shape[0]
    V = out_w.shape[0]
    D_pad = _round_up(D, 128)
    TN = min(_round_up(tn, 128), _round_up(V, 128))     # lane-dense vocab tile
    V_pad = _round_up(V, TN)                            # kept tight to V

    return {
        "D": D, "V": V, "D_pad": D_pad, "V_pad": V_pad, "TN": TN,
        "out_dtype": out_dtype,
        "dw_t": jnp.pad(dense_w.T, ((0, D_pad - D), (0, D_pad - D))).astype(jnp.bfloat16),
        "db": jnp.pad(jnp.asarray(params["dense_b"], jnp.float32).reshape(1, D),
                      ((0, 0), (0, D_pad - D))),
        "ln_g": jnp.pad(jnp.asarray(params["ln_g"], jnp.float32).reshape(1, D),
                        ((0, 0), (0, D_pad - D))),
        "ln_b": jnp.pad(jnp.asarray(params["ln_b"], jnp.float32).reshape(1, D),
                        ((0, 0), (0, D_pad - D))),
        "ow_t": jnp.pad(out_w.T, ((0, D_pad - D), (0, V_pad - V))).astype(jnp.bfloat16),
        "ob": jnp.pad(jnp.asarray(params["out_b"], jnp.float32).reshape(1, V),
                      ((0, 0), (0, V_pad - V))),
    }


def mix_phoneme_lm_head(features, targets_sp, prepped, *, keep_padded=False):
    """features: [B, T, D] (or [N, D]); targets_sp: int array flattened to [N].

    Matches the PyTorch module's masked_tokens=None path.  With
    keep_padded=True returns (padded logits [W_pad, V_pad], targets [W], (W, V))
    so the consumer can trim / fuse without an extra HBM slice pass.
    """
    D, V = prepped["D"], prepped["V"]
    D_pad, V_pad, TN = prepped["D_pad"], prepped["V_pad"], prepped["TN"]

    feats = jnp.asarray(features, jnp.float32).reshape(-1, D)
    N = feats.shape[0]

    # ---- word segmentation bookkeeping (host; only tiny int arrays) --------
    # TODO(synk): the word count W is data-dependent (so is the output shape),
    # hence run-length grouping stays outside the kernels; at production scale
    # fetch targets asynchronously / keep them host-resident to avoid this sync.
    t = np.asarray(targets_sp).reshape(-1)
    assert t.shape[0] == N
    prev = np.concatenate(([-1], t[:-1]))
    is_start = prev != t                       # module semantics: prev == t => continuation
    W = int(is_start.sum())
    seg_ids = (np.cumsum(is_start) - 1).astype(np.int32)       # word id per token
    word_lens = np.bincount(seg_ids, minlength=W).astype(np.float32)
    targets_out = jnp.asarray(t[is_start])

    # ---- bucketed, sublane/lane-friendly shapes ----------------------------
    N_pad = _bucket(N, TOKEN_TILE)             # multiple of TOKEN_TILE
    W_pad = _bucket(W, 16)                     # 16s, not 128s (bf16 sublane pack)
    TW = min(W_pad, 256)                       # word tile for A2 (W_pad % TW == 0)
    n_tok_tiles = N_pad // TOKEN_TILE
    ROWS = TOKEN_TILE + 8                      # words reachable from one token tile
    W_sum = W_pad + ROWS                       # pooling accumulator rows (slack incl.)

    # per-token-tile base word id, aligned down to the f32 sublane tile (8)
    seg_pad = np.full((N_pad,), max(W - 1, 0), np.int32)
    seg_pad[:N] = seg_ids
    w_starts = jnp.asarray((seg_pad[::TOKEN_TILE] // 8) * 8, jnp.int32)
    seg2d = jnp.asarray(seg_pad.reshape(1, N_pad))
    inv_len = jnp.asarray(np.pad(1.0 / word_lens, (0, W_pad - W)),
                          jnp.float32).reshape(W_pad, 1)

    # activations: padded + bf16 (halves the pooling DMA; f32 accumulation on MXU)
    feats_p = jnp.pad(feats, ((0, N_pad - N), (0, D_pad - D))).astype(jnp.bfloat16)

    # ---- kernel A1: per-word feature sums (tiled over tokens) ---------------
    pooled_sum = pl.pallas_call(
        _make_pool_kernel(TOKEN_TILE, ROWS),
        out_shape=jax.ShapeDtypeStruct((W_sum, D_pad), jnp.float32),
        grid_spec=pltpu.PrefetchScalarGridSpec(
            num_scalar_prefetch=1,                                   # w_starts -> SMEM
            grid=(n_tok_tiles,),
            in_specs=[
                pl.BlockSpec((1, TOKEN_TILE), lambda n, wb: (0, n)),      # seg ids
                pl.BlockSpec((TOKEN_TILE, D_pad), lambda n, wb: (n, 0)),  # feature tile
            ],
            out_specs=pl.BlockSpec((W_sum, D_pad), lambda n, wb: (0, 0)),  # resident acc
        ),
        compiler_params=pltpu.CompilerParams(
            dimension_semantics=("arbitrary",),
            vmem_limit_bytes=64 * 1024 * 1024),
    )(w_starts, seg2d, feats_p)

    # ---- kernel A2: mean + dense + gelu + layernorm (tiled over words) ------
    xn = pl.pallas_call(
        _make_transform_kernel(D),
        out_shape=jax.ShapeDtypeStruct((W_pad, D_pad), jnp.bfloat16),
        grid_spec=pltpu.PrefetchScalarGridSpec(
            num_scalar_prefetch=0,
            grid=(W_pad // TW,),
            in_specs=[
                pl.BlockSpec((TW, D_pad), lambda i: (i, 0)),      # word sums tile
                pl.BlockSpec((TW, 1), lambda i: (i, 0)),          # 1 / word_len
                pl.BlockSpec((D_pad, D_pad), lambda i: (0, 0)),   # dense W^T (resident)
                pl.BlockSpec((1, D_pad), lambda i: (0, 0)),       # dense bias
                pl.BlockSpec((1, D_pad), lambda i: (0, 0)),       # LN gamma
                pl.BlockSpec((1, D_pad), lambda i: (0, 0)),       # LN beta
            ],
            out_specs=pl.BlockSpec((TW, D_pad), lambda i: (i, 0)),
        ),
        compiler_params=pltpu.CompilerParams(
            dimension_semantics=("parallel",),
            vmem_limit_bytes=32 * 1024 * 1024),
    )(pooled_sum, inv_len, prepped["dw_t"], prepped["db"],
      prepped["ln_g"], prepped["ln_b"])

    # ---- kernel B: output projection, pipelined over lane-dense vocab tiles --
    # TODO(synk): mark the resident xn operand pipeline_mode=pl.Buffered(1)
    # once single-buffered pipeline_mode is confirmed on the target jax build
    # (saves one xn-sized VMEM buffer, mainly relevant on v7x's 64 MiB VMEM).
    logits_pad = pl.pallas_call(
        _projection_kernel,
        out_shape=jax.ShapeDtypeStruct((W_pad, V_pad), prepped["out_dtype"]),
        grid_spec=pltpu.PrefetchScalarGridSpec(
            num_scalar_prefetch=0,
            grid=(V_pad // TN,),
            in_specs=[
                pl.BlockSpec((W_pad, D_pad), lambda j: (0, 0)),   # xn: resident
                pl.BlockSpec((D_pad, TN), lambda j: (0, j)),      # weight tile: pipelined
                pl.BlockSpec((1, TN), lambda j: (0, j)),          # bias tile
            ],
            out_specs=pl.BlockSpec((W_pad, TN), lambda j: (0, j)),
        ),
        compiler_params=pltpu.CompilerParams(
            dimension_semantics=("parallel",),    # v7x: split vocab tiles across both TCs
            vmem_limit_bytes=64 * 1024 * 1024),
    )(xn, prepped["ow_t"], prepped["ob"])

    if keep_padded:
        return logits_pad, targets_out, (W, V)
    return logits_pad[:W, :V], targets_out


def reference(features, targets_sp, params):
    """Pure JAX/numpy reference of the PyTorch forward (exact erf GELU)."""
    D = features.shape[-1]
    feats = np.asarray(features, np.float32).reshape(-1, D)
    t = np.asarray(targets_sp).reshape(-1)
    prev = np.concatenate(([-1], t[:-1]))
    is_start = prev != t
    starts = np.nonzero(is_start)[0]
    bounds = np.concatenate([starts, [len(t)]])
    pooled = np.stack([feats[s:e].mean(0) for s, e in zip(bounds[:-1], bounds[1:])])

    x = pooled @ np.asarray(params["dense_w"]).T + np.asarray(params["dense_b"])
    x = np.asarray(jax.nn.gelu(jnp.asarray(x), approximate=False))
    mu = x.mean(-1, keepdims=True)
    var = ((x - mu) ** 2).mean(-1, keepdims=True)
    x = (x - mu) / np.sqrt(var + LN_EPS)
    x = x * np.asarray(params["ln_g"]) + np.asarray(params["ln_b"])
    x = x @ np.asarray(params["out_w"]).T + np.asarray(params["out_b"])
    return x, t[is_start]


if __name__ == "__main__":
    B, T, D, V = 2, 8, 96, 320   # batch, seq, embed_dim, output_dim (vocab)

    key = jax.random.PRNGKey(0)
    k_feat, k_dw, k_ow = jax.random.split(key, 3)

    features = jax.random.normal(k_feat, (B, T, D), jnp.float32)
    # deterministic phoneme targets with runs (each run = one word) -> 7 words
    targets_sp = jnp.array(
        [3, 3, 5, 5, 5, 7, 2, 2, 2, 9, 9, 4, 4, 4, 4, 1], jnp.int32
    ).reshape(B, T)

    params = {
        "dense_w": 0.02 * jax.random.normal(k_dw, (D, D), jnp.float32),
        "dense_b": jnp.zeros((D,), jnp.float32),
        "ln_g": jnp.ones((D,), jnp.float32),
        "ln_b": jnp.zeros((D,), jnp.float32),
        "out_w": 0.02 * jax.random.normal(k_ow, (V, D), jnp.float32),
        "out_b": jnp.zeros((V,), jnp.float32),
    }

    # Weight prep happens once (cache across calls).  tn=128 so the toy vocab
    # still exercises a multi-step pipelined vocab grid (V_pad=384 -> 3 tiles).
    prepped = prepare_lm_head_params(params, tn=128)

    logits_pad, tgt, (W, Vr) = mix_phoneme_lm_head(
        features, targets_sp, prepped, keep_padded=True)
    logits_pad = jax.block_until_ready(logits_pad)
    logits = np.asarray(logits_pad)[:W, :Vr]        # consumer-side trim (host, free)

    ref_logits, ref_tgt = reference(features, targets_sp, params)
    # bf16 matmul inputs (f32 accumulation) -> bf16-appropriate tolerance.
    np.testing.assert_allclose(logits, np.asarray(ref_logits), rtol=1e-2, atol=1e-2)
    np.testing.assert_array_equal(np.asarray(tgt), np.asarray(ref_tgt))

    print("KERNEL_OK")
</pallas_src>

<mosaic_0001>
module attributes {stable_mosaic.version = 11 : i64} {
  func.func @pool_kernel(%arg0: i32, %arg1: memref<1xi32, #tpu.memory_space<smem>>, %arg2: memref<1x128xi32, #tpu.memory_space<vmem>>, %arg3: memref<128x128xbf16, #tpu.memory_space<vmem>>, %arg4: memref<152x128xf32, #tpu.memory_space<vmem>>) attributes {dimension_semantics = [#tpu.dimension_semantics<arbitrary>], iteration_bounds = array<i64: 1>, scalar_prefetch = 1 : i64, scratch_operands = 0 : i64, tpu.core_type = #tpu.core_type<tc>, window_params = [{transform_indices = @transform_0, window_bounds = array<i64: 1, 128>}, {transform_indices = @transform_1, window_bounds = array<i64: 128, 128>}, {pipeline_mode = #tpu.pipeline_mode<synchronous>, transform_indices = @transform_2, window_bounds = array<i64: 152, 128>}]} {
    %c0_i32 = arith.constant 0 : i32
    %0 = arith.cmpi eq, %arg0, %c0_i32 : i32
    %1 = arith.extui %0 : i1 to i32
    %c0_i32_0 = arith.constant 0 : i32
    %2 = arith.cmpi ne, %1, %c0_i32_0 : i32
    scf.if %2 {
      %cst_6 = arith.constant 0.000000e+00 : f32
      %22 = vector.broadcast %cst_6 : f32 to vector<152x128xf32>
      %c0_7 = arith.constant 0 : index
      %c0_8 = arith.constant 0 : index
      %23 = vector.load %arg4[%c0_7, %c0_8] : memref<152x128xf32, #tpu.memory_space<vmem>>, vector<152x128xf32>
      tpu.vector_store %arg4[%c0_7, %c0_8], %22 {strides = array<i32>} : memref<152x128xf32, #tpu.memory_space<vmem>>, vector<152x128xf32>,
    } else {
    }
    %3 = arith.index_cast %arg0 : i32 to index
    %4 = memref.load %arg1[%3] : memref<1xi32, #tpu.memory_space<smem>>
    %5 = tpu.assume_multiple %4, 8 : i32
    %6 = tpu.iota {dimensions = array<i32: 0>} : vector<136x128xi32>
    %7 = vector.broadcast %5 : i32 to vector<136x128xi32>
    %8 = arith.addi %7, %6 : vector<136x128xi32>
    %c0 = arith.constant 0 : index
    %c0_1 = arith.constant 0 : index
    %9 = vector.load %arg2[%c0, %c0_1] : memref<1x128xi32, #tpu.memory_space<vmem>>, vector<1x128xi32>
    %10 = vector.broadcast %9 : vector<1x128xi32> to vector<136x128xi32>
    %11 = arith.cmpi eq, %10, %8 : vector<136x128xi32>
    %12 = arith.extui %11 : vector<136x128xi1> to vector<136x128xi32>
    %13 = arith.sitofp %12 : vector<136x128xi32> to vector<136x128xf32>
    %14 = arith.truncf %13 : vector<136x128xf32> to vector<136x128xbf16>
    %c0_2 = arith.constant 0 : index
    %c0_3 = arith.constant 0 : index
    %15 = vector.load %arg3[%c0_2, %c0_3] : memref<128x128xbf16, #tpu.memory_space<vmem>>, vector<128x128xbf16>
    %cst = arith.constant dense<0.000000e+00> : vector<136x128xf32>
    %16 = tpu.matmul %14, %15, %cst {dimension_numbers = #tpu.dot_dimension_numbers<[1], [0], [0], [1], [0, 0, 1, 1], [], []>} : vector<136x128xbf16>, vector<128x128xbf16>, vector<136x128xf32> -> vector<136x128xf32>
    %17 = arith.index_cast %5 : i32 to index
    %c0_4 = arith.constant 0 : index
    %18 = vector.load %arg4[%17, %c0_4] : memref<152x128xf32, #tpu.memory_space<vmem>>, vector<136x128xf32>
    %19 = arith.addf %18, %16 : vector<136x128xf32>
    %20 = arith.index_cast %5 : i32 to index
    %c0_5 = arith.constant 0 : index
    %21 = vector.load %arg4[%20, %c0_5] : memref<152x128xf32, #tpu.memory_space<vmem>>, vector<136x128xf32>
    tpu.vector_store %arg4[%20, %c0_5], %19 {strides = array<i32>} : memref<152x128xf32, #tpu.memory_space<vmem>>, vector<136x128xf32>,
    return
  }
  func.func @transform_0(%arg0: i32, %arg1: memref<1xi32, #tpu.memory_space<smem>>) -> (i32, i32) {
    %c0_i32 = arith.constant 0 : i32
    %c0_i32_0 = arith.constant 0 : i32
    return %c0_i32, %arg0 : i32, i32
  }
  func.func @transform_1(%arg0: i32, %arg1: memref<1xi32, #tpu.memory_space<smem>>) -> (i32, i32) {
    %c0_i32 = arith.constant 0 : i32
    %c0_i32_0 = arith.constant 0 : i32
    return %arg0, %c0_i32 : i32, i32
  }
  func.func @transform_2(%arg0: i32, %arg1: memref<1xi32, #tpu.memory_space<smem>>) -> (i32, i32) {
    %c0_i32 = arith.constant 0 : i32
    %c0_i32_0 = arith.constant 0 : i32
    %c0_i32_1 = arith.constant 0 : i32
    return %c0_i32, %c0_i32_0 : i32, i32
  }
}

</mosaic_0001>

<llo_original>
// kernel: tpu_custom_call.1
$region0: #{tpu_custom_call.1}
  #allocation0 [shape = 'u32[]', space=smem, size = 0x4, offset = 0x4, fixed_abs, tag = 'smem constant byte address 0x4 - core index']
  #allocation1 [shape = 'u32[144,128]{1,0:T(1,128)}', space=vmem, size = 0x12000, scoped, tag = 'internal scratch']
  #allocation2 [shape = 's32[1]{0}', space=sflag, size = 0x4, scoped, tag = 'scoped memory for tpu_custom_call.1']
  #allocation3 [shape = 's32[1]{0:T(128)S(6)}', space=smem, size = 0x200, scoped, tag = 'prefetched SMEM operand 0']
  %s0 = inlined_call_operand.<no memory space> [shape: s32[1], index: 0, kind: input, shape index: {}]
  %s1 = inlined_call_operand.hbm [shape: s32[1,128], index: 1, kind: input, shape index: {}]
  %s2 = inlined_call_operand.hbm [shape: bf16[128,128], index: 2, kind: input, shape index: {}]
  %s3 = inlined_call_operand.hbm [shape: f32[152,128], index: 3, kind: output, shape index: {}]
  %s4 = sld [smem:[#allocation0]]
  $region30: #{tpu_custom_call.1} parent=0
    _
  %s6 = ssub.s32 1, %s4
  %s7 = scalar_select 0, %s6, %s4
  %8 = sst [smem:[#allocation3]] %s0
  $region1: #{tpu_custom_call.1} parent=0
    #allocation4 [shape = 'u8[512]{0}', space=vmem, size = 0x400, scoped, tag = 'input window, operand 1, single buffered']
    #allocation5 [shape = 's32[1]{0}', space=sflag, size = 0x4, scoped, tag = 'scoped memory for tpu_custom_call.1']
    #allocation6 [shape = 's32[1]{0}', space=sflag, size = 0x4, scoped, tag = 'scoped memory for tpu_custom_call.1']
    #allocation7 [shape = 'u8[32768]{0}', space=vmem, size = 0x8000, scoped, tag = 'input window, operand 2, single buffered']
    #allocation8 [shape = 's32[1]{0}', space=sflag, size = 0x4, scoped, tag = 'scoped memory for tpu_custom_call.1']
    #allocation9 [shape = 'u8[77824]{0}', space=vmem, size = 0x13000, scoped, tag = 'output window, operand 0, single buffered']
    %9 = vsyncpa [#allocation5], 0
    %10 = vsyncpa [#allocation8], 0
    %11 = vsyncpa [#allocation6], 0
    // Predicated region
    $region2: #{tpu_custom_call.1} parent=1 // pred_check
      _
    $region3: #{tpu_custom_call.1} parent=1 // pred_check_branch
      %13 = sbr.rel (0) target = $region5
    $region4: #{tpu_custom_call.1} parent=1 // pred_region
      %s15 = ssub.s32 16, 16
      %16 = vsyncadd [#allocation5], %s15
      %s18 = sshll.u32 [#allocation4], 4
      %s19 = int_to_ptr.vmem [resolvable:$true] %s18
      %21 = dma.hbm_to_vmem [thread:$0]  %s1, 16, %s19, [#allocation5]
    $region5: #{tpu_custom_call.1} parent=1 // pred_fallthru
      _
    // Predicated region
    $region6: #{tpu_custom_call.1} parent=1 // pred_check
      _
    $region7: #{tpu_custom_call.1} parent=1 // pred_check_branch
      %23 = sbr.rel (0) target = $region9
    $region8: #{tpu_custom_call.1} parent=1 // pred_region
      %s25 = ssub.s32 1024, 1024
      %26 = vsyncadd [#allocation8], %s25
      %s27 = sshll.u32 [#allocation7], 4
      %s28 = int_to_ptr.vmem [resolvable:$true] %s27
      %33 = dma.hbm_to_vmem [thread:$0]  %s2, 1024, %s28, [#allocation8], 64, 64, 4
    $region9: #{tpu_custom_call.1} parent=1 // pred_fallthru
      _
    // Predicated region
    $region10: #{tpu_custom_call.1} parent=1 // pred_check
      _
    $region11: #{tpu_custom_call.1} parent=1 // pred_check_branch
      %35 = sbr.rel (0) target = $region13
    $region12: #{tpu_custom_call.1} parent=1 // pred_region
      %36 = dma.done [#allocation5], 16
    $region13: #{tpu_custom_call.1} parent=1 // pred_fallthru
      _
    // Predicated region
    $region14: #{tpu_custom_call.1} parent=1 // pred_check
      _
    $region15: #{tpu_custom_call.1} parent=1 // pred_check_branch
      %38 = sbr.rel (0) target = $region17
    $region16: #{tpu_custom_call.1} parent=1 // pred_region
      %39 = dma.done [#allocation8], 1024
    $region17: #{tpu_custom_call.1} parent=1 // pred_fallthru
      _
    %p41 = scmp.eq.s32.totalorder 0, 0
    // Predicated region
    $region18: #{tpu_custom_call.1} parent=1 // pred_check
      %p42 = pneg %p41
    $region19: #{tpu_custom_call.1} parent=1 // pred_check_branch
      %44 = sbr.rel (%p42) target = $region21
    $region20: #{tpu_custom_call.1} parent=1 // pred_region
      %45 = vst [vmem:[#allocation9] sm:$0xff] 0.0
      %46 = vst [vmem:[#allocation9 + $0x8] sm:$0xff] 0.0
      %47 = vst [vmem:[#allocation9 + $0x10] sm:$0xff] 0.0
      %48 = vst [vmem:[#allocation9 + $0x18] sm:$0xff] 0.0
      %49 = vst [vmem:[#allocation9 + $0x20] sm:$0xff] 0.0
      %50 = vst [vmem:[#allocation9 + $0x28] sm:$0xff] 0.0
      %51 = vst [vmem:[#allocation9 + $0x30] sm:$0xff] 0.0
      %52 = vst [vmem:[#allocation9 + $0x38] sm:$0xff] 0.0
      %53 = vst [vmem:[#allocation9 + $0x40] sm:$0xff] 0.0
      %54 = vst [vmem:[#allocation9 + $0x48] sm:$0xff] 0.0
      %55 = vst [vmem:[#allocation9 + $0x50] sm:$0xff] 0.0
      %56 = vst [vmem:[#allocation9 + $0x58] sm:$0xff] 0.0
      %57 = vst [vmem:[#allocation9 + $0x60] sm:$0xff] 0.0
      %58 = vst [vmem:[#allocation9 + $0x68] sm:$0xff] 0.0
      %59 = vst [vmem:[#allocation9 + $0x70] sm:$0xff] 0.0
      %60 = vst [vmem:[#allocation9 + $0x78] sm:$0xff] 0.0
      %61 = vst [vmem:[#allocation9 + $0x80] sm:$0xff] 0.0
      %62 = vst [vmem:[#allocation9 + $0x88] sm:$0xff] 0.0
      %63 = vst [vmem:[#allocation9 + $0x90] sm:$0xff] 0.0
    $region21: #{tpu_custom_call.1} parent=1 // pred_fallthru
      _
    %s64 = sld [smem:[#allocation3]]
    %v65 = vlaneseq
    %v66 = vshrl.u32 %v65, 7
    %v67 = vadd.s32 %v66, 8
    %v68 = vadd.s32 %v66, 16
    %v69 = vadd.s32 %v66, 24
    %v70 = vadd.s32 %v66, 32
    %v71 = vadd.s32 %v66, 40
    %v72 = vadd.s32 %v66, 48
    %v73 = vadd.s32 %v66, 56
    %v74 = vadd.s32 %v66, 64
    %v75 = vadd.s32 %v66, 72
    %v76 = vadd.s32 %v66, 80
    %v77 = vadd.s32 %v66, 88
    %v78 = vadd.s32 %v66, 96
    %v79 = vadd.s32 %v66, 104
    %v80 = vadd.s32 %v66, 112
    %v81 = vadd.s32 %v66, 120
    %v82 = vadd.s32 %v66, 128
    %v83 = vstv %s64
    %v84 = vadd.s32 %v83, %v66
    %v85 = vadd.s32 %v83, %v67
    %v86 = vadd.s32 %v83, %v68
    %v87 = vadd.s32 %v83, %v69
    %v88 = vadd.s32 %v83, %v70
    %v89 = vadd.s32 %v83, %v71
    %v90 = vadd.s32 %v83, %v72
    %v91 = vadd.s32 %v83, %v73
    %v92 = vadd.s32 %v83, %v74
    %v93 = vadd.s32 %v83, %v75
    %v94 = vadd.s32 %v83, %v76
    %v95 = vadd.s32 %v83, %v77
    %v96 = vadd.s32 %v83, %v78
    %v97 = vadd.s32 %v83, %v79
    %v98 = vadd.s32 %v83, %v80
    %v99 = vadd.s32 %v83, %v81
    %v100 = vadd.s32 %v83, %v82
    %v101 = vld [vmem:[#allocation4] sm:$0x1]
    %v102 = vlaneseq
    %v103 = vshrl.u32 %v102, 7
    %v104 = vsub.s32 0, %v103
    %v105 = vrot.slane %v101, %v104
    %vm106 = vcmp.eq.s32.totalorder %v105, %v84
    %vm107 = vcmp.eq.s32.totalorder %v105, %v85
    %vm108 = vcmp.eq.s32.totalorder %v105, %v86
    %vm109 = vcmp.eq.s32.totalorder %v105, %v87
    %vm110 = vcmp.eq.s32.totalorder %v105, %v88
    %vm111 = vcmp.eq.s32.totalorder %v105, %v89
    %vm112 = vcmp.eq.s32.totalorder %v105, %v90
    %vm113 = vcmp.eq.s32.totalorder %v105, %v91
    %vm114 = vcmp.eq.s32.totalorder %v105, %v92
    %vm115 = vcmp.eq.s32.totalorder %v105, %v93
    %vm116 = vcmp.eq.s32.totalorder %v105, %v94
    %vm117 = vcmp.eq.s32.totalorder %v105, %v95
    %vm118 = vcmp.eq.s32.totalorder %v105, %v96
    %vm119 = vcmp.eq.s32.totalorder %v105, %v97
    %vm120 = vcmp.eq.s32.totalorder %v105, %v98
    %vm121 = vcmp.eq.s32.totalorder %v105, %v99
    %vm122 = vcmp.eq.s32.totalorder %v105, %v100
    %v123 = vsel %vm106, 1, 0
    %v124 = vsel %vm107, 1, 0
    %v125 = vsel %vm108, 1, 0
    %v126 = vsel %vm109, 1, 0
    %v127 = vsel %vm110, 1, 0
    %v128 = vsel %vm111, 1, 0
    %v129 = vsel %vm112, 1, 0
    %v130 = vsel %vm113, 1, 0
    %v131 = vsel %vm114, 1, 0
    %v132 = vsel %vm115, 1, 0
    %v133 = vsel %vm116, 1, 0
    %v134 = vsel %vm117, 1, 0
    %v135 = vsel %vm118, 1, 0
    %v136 = vsel %vm119, 1, 0
    %v137 = vsel %vm120, 1, 0
    %v138 = vsel %vm121, 1, 0
    %v139 = vsel %vm122, 1, 0
    %v140 = vcvt.s32.f32 %v123
    %v141 = vcvt.s32.f32 %v124
    %v142 = vcvt.s32.f32 %v125
    %v143 = vcvt.s32.f32 %v126
    %v144 = vcvt.s32.f32 %v127
    %v145 = vcvt.s32.f32 %v128
    %v146 = vcvt.s32.f32 %v129
    %v147 = vcvt.s32.f32 %v130
    %v148 = vcvt.s32.f32 %v131
    %v149 = vcvt.s32.f32 %v132
    %v150 = vcvt.s32.f32 %v133
    %v151 = vcvt.s32.f32 %v134
    %v152 = vcvt.s32.f32 %v135
    %v153 = vcvt.s32.f32 %v136
    %v154 = vcvt.s32.f32 %v137
    %v155 = vcvt.s32.f32 %v138
    %v156 = vcvt.s32.f32 %v139
    %v157 = vpack.c.bf16 %v141, %v140
    %v158 = vpack.c.bf16 %v143, %v142
    %v159 = vpack.c.bf16 %v145, %v144
    %v160 = vpack.c.bf16 %v147, %v146
    %v161 = vpack.c.bf16 %v149, %v148
    %v162 = vpack.c.bf16 %v151, %v150
    %v163 = vpack.c.bf16 %v153, %v152
    %v164 = vpack.c.bf16 %v155, %v154
    %v165 = vpack.c.bf16 %v156, %v156
    %v166 = vld [vmem:[#allocation7] sm:$0xf]
    %v167 = vld [vmem:[#allocation7 + $0x4] sm:$0xf]
    %v168 = vld [vmem:[#allocation7 + $0x8] sm:$0xf]
    %v169 = vld [vmem:[#allocation7 + $0xc] sm:$0xf]
    %v170 = vld [vmem:[#allocation7 + $0x10] sm:$0xf]
    %v171 = vld [vmem:[#allocation7 + $0x14] sm:$0xf]
    %v172 = vld [vmem:[#allocation7 + $0x18] sm:$0xf]
    %v173 = vld [vmem:[#allocation7 + $0x1c] sm:$0xf]
    %v174 = vld [vmem:[#allocation7 + $0x20] sm:$0xf]
    %v175 = vld [vmem:[#allocation7 + $0x24] sm:$0xf]
    %v176 = vld [vmem:[#allocation7 + $0x28] sm:$0xf]
    %v177 = vld [vmem:[#allocation7 + $0x2c] sm:$0xf]
    %v178 = vld [vmem:[#allocation7 + $0x30] sm:$0xf]
    %v179 = vld [vmem:[#allocation7 + $0x34] sm:$0xf]
    %v180 = vld [vmem:[#allocation7 + $0x38] sm:$0xf]
    %v181 = vld [vmem:[#allocation7 + $0x3c] sm:$0xf]
    %v198 = vunpack.c.l.b16 %v166
    %v199 = vunpack.c.l.b16 %v167
    %v200 = vunpack.c.l.b16 %v168
    %v201 = vunpack.c.l.b16 %v169
    %v202 = vunpack.c.l.b16 %v170
    %v203 = vunpack.c.l.b16 %v171
    %v204 = vunpack.c.l.b16 %v172
    %v205 = vunpack.c.l.b16 %v173
    %v206 = vunpack.c.l.b16 %v174
    %v207 = vunpack.c.l.b16 %v175
    %v208 = vunpack.c.l.b16 %v176
    %v209 = vunpack.c.l.b16 %v177
    %v210 = vunpack.c.l.b16 %v178
    %v211 = vunpack.c.l.b16 %v179
    %v212 = vunpack.c.l.b16 %v180
    %v213 = vunpack.c.l.b16 %v181
    %v214 = vpack.c.b16 %v199, %v198
    %v215 = vpack.c.b16 %v201, %v200
    %v216 = vpack.c.b16 %v203, %v202
    %v217 = vpack.c.b16 %v205, %v204
    %v218 = vpack.c.b16 %v207, %v206
    %v219 = vpack.c.b16 %v209, %v208
    %v220 = vpack.c.b16 %v211, %v210
    %v221 = vpack.c.b16 %v213, %v212
    %230 = vmatprep.subr.bf16.mxu0 0
    %231 = vmatpush1.bf16.msra.mxu0 %v214
    %232 = vmatprep.subr.bf16.mxu0 0
    %233 = vmatpush1.bf16.msra.mxu0 %v215
    %234 = vmatprep.subr.bf16.mxu0 0
    %235 = vmatpush1.bf16.msra.mxu0 %v216
    %236 = vmatprep.subr.bf16.mxu0 0
    %237 = vmatpush1.bf16.msra.mxu0 %v217
    %238 = vmatprep.subr.bf16.mxu0 0
    %239 = vmatpush1.bf16.msra.mxu0 %v218
    %240 = vmatprep.subr.bf16.mxu0 0
    %241 = vmatpush1.bf16.msra.mxu0 %v219
    %242 = vmatprep.subr.bf16.mxu0 0
    %243 = vmatpush1.bf16.msra.mxu0 %v220
    %244 = vmatprep.subr.bf16.mxu0 0
    %245 = vmatpush1.bf16.msra.mxu0 %v221
    %246 = vmatprep.subr.bf16.mxu0 0
    %247 = vmatpush1.bf16.msra.mxu0 0
    %248 = vmatprep.subr.bf16.mxu0 0
    %249 = vmatpush1.bf16.msra.mxu0 0
    %250 = vmatprep.subr.bf16.mxu0 0
    %251 = vmatpush1.bf16.msra.mxu0 0
    %252 = vmatprep.subr.bf16.mxu0 0
    %253 = vmatpush1.bf16.msra.mxu0 0
    %254 = vmatprep.subr.bf16.mxu0 0
    %255 = vmatpush1.bf16.msra.mxu0 0
    %256 = vmatprep.subr.bf16.mxu0 0
    %257 = vmatpush1.bf16.msra.mxu0 0
    %258 = vmatprep.subr.bf16.mxu0 0
    %259 = vmatpush1.bf16.msra.mxu0 0
    %260 = vmatprep.subr.bf16.mxu0 0
    %261 = vmatpush1.bf16.msra.mxu0 0
    %262 = vmatprep.mubr.bf16.mxu0 0
    %263 = vmatmul.mubr.bf16.gmra.mrb[0].mxu0 %v157
    %v264 = vpop.f32.mrb[0].mxu0
    %v265 = vadd.f32 0.0, %v264
    %v266 = vpop.f32.mrb[0].mxu0
    %v267 = vpop.f32.mrb[0].mxu0
    %v268 = vadd.f32 0.0, %v267
    %v269 = vpop.f32.mrb[0].mxu0
    %270 = vmatprep.mubr.bf16.mxu0 0
    %271 = vmatmul.mubr.bf16.gmra.mrb[0].mxu0 %v158
    %v272 = vpop.f32.mrb[0].mxu0
    %v273 = vadd.f32 0.0, %v272
    %v274 = vpop.f32.mrb[0].mxu0
    %v275 = vpop.f32.mrb[0].mxu0
    %v276 = vadd.f32 0.0, %v275
    %v277 = vpop.f32.mrb[0].mxu0
    %278 = vmatprep.mubr.bf16.mxu0 0
    %279 = vmatmul.mubr.bf16.gmra.mrb[0].mxu0 %v159
    %v280 = vpop.f32.mrb[0].mxu0
    %v281 = vadd.f32 0.0, %v280
    %v282 = vpop.f32.mrb[0].mxu0
    %v283 = vpop.f32.mrb[0].mxu0
    %v284 = vadd.f32 0.0, %v283
    %v285 = vpop.f32.mrb[0].mxu0
    %286 = vmatprep.mubr.bf16.mxu0 0
    %287 = vmatmul.mubr.bf16.gmra.mrb[0].mxu0 %v160
    %v288 = vpop.f32.mrb[0].mxu0
    %v289 = vadd.f32 0.0, %v288
    %v290 = vpop.f32.mrb[0].mxu0
    %v291 = vpop.f32.mrb[0].mxu0
    %v292 = vadd.f32 0.0, %v291
    %v293 = vpop.f32.mrb[0].mxu0
    %294 = vmatprep.mubr.bf16.mxu0 0
    %295 = vmatmul.mubr.bf16.gmra.mrb[0].mxu0 %v161
    %v296 = vpop.f32.mrb[0].mxu0
    %v297 = vadd.f32 0.0, %v296
    %v298 = vpop.f32.mrb[0].mxu0
    %v299 = vpop.f32.mrb[0].mxu0
    %v300 = vadd.f32 0.0, %v299
    %v301 = vpop.f32.mrb[0].mxu0
    %302 = vmatprep.mubr.bf16.mxu0 0
    %303 = vmatmul.mubr.bf16.gmra.mrb[0].mxu0 %v162
    %v304 = vpop.f32.mrb[0].mxu0
    %v305 = vadd.f32 0.0, %v304
    %v306 = vpop.f32.mrb[0].mxu0
    %v307 = vpop.f32.mrb[0].mxu0
    %v308 = vadd.f32 0.0, %v307
    %v309 = vpop.f32.mrb[0].mxu0
    %310 = vmatprep.mubr.bf16.mxu0 0
    %311 = vmatmul.mubr.bf16.gmra.mrb[0].mxu0 %v163
    %v312 = vpop.f32.mrb[0].mxu0
    %v313 = vadd.f32 0.0, %v312
    %v314 = vpop.f32.mrb[0].mxu0
    %v315 = vpop.f32.mrb[0].mxu0
    %v316 = vadd.f32 0.0, %v315
    %v317 = vpop.f32.mrb[0].mxu0
    %318 = vmatprep.mubr.bf16.mxu0 0
    %319 = vmatmul.mubr.bf16.gmra.mrb[0].mxu0 %v164
    %v320 = vpop.f32.mrb[0].mxu0
    %v321 = vadd.f32 0.0, %v320
    %v322 = vpop.f32.mrb[0].mxu0
    %v323 = vpop.f32.mrb[0].mxu0
    %v324 = vadd.f32 0.0, %v323
    %v325 = vpop.f32.mrb[0].mxu0
    %326 = vmatprep.mubr.bf16.mxu0 0
    %327 = vmatmul.mubr.bf16.gmra.mrb[0].mxu0 %v165
    %v328 = vpop.f32.mrb[0].mxu0
    %v329 = vadd.f32 0.0, %v328
    %v330 = vpop.f32.mrb[0].mxu0
    %v331 = vpop.f32.mrb[0].mxu0
    %v332 = vpop.f32.mrb[0].mxu0
    %333 = vdwg.mxu0
    %s334 = scalar_lea.vmem [#allocation9], %s64
    %v335 = vld [vmem:[%s334] sm:$0xff]
    %v336 = vld [vmem:[%s334 + $0x8] sm:$0xff]
    %v337 = vld [vmem:[%s334 + $0x10] sm:$0xff]
    %v338 = vld [vmem:[%s334 + $0x18] sm:$0xff]
    %v339 = vld [vmem:[%s334 + $0x20] sm:$0xff]
    %v340 = vld [vmem:[%s334 + $0x28] sm:$0xff]
    %v341 = vld [vmem:[%s334 + $0x30] sm:$0xff]
    %v342 = vld [vmem:[%s334 + $0x38] sm:$0xff]
    %v343 = vld [vmem:[%s334 + $0x40] sm:$0xff]
    %v344 = vld [vmem:[%s334 + $0x48] sm:$0xff]
    %v345 = vld [vmem:[%s334 + $0x50] sm:$0xff]
    %v346 = vld [vmem:[%s334 + $0x58] sm:$0xff]
    %v347 = vld [vmem:[%s334 + $0x60] sm:$0xff]
    %v348 = vld [vmem:[%s334 + $0x68] sm:$0xff]
    %v349 = vld [vmem:[%s334 + $0x70] sm:$0xff]
    %v350 = vld [vmem:[%s334 + $0x78] sm:$0xff]
    %v351 = vld [vmem:[%s334 + $0x80] sm:$0xff]
    %v352 = vadd.f32 %v335, %v265
    %v353 = vadd.f32 %v336, %v268
    %v354 = vadd.f32 %v337, %v273
    %v355 = vadd.f32 %v338, %v276
    %v356 = vadd.f32 %v339, %v281
    %v357 = vadd.f32 %v340, %v284
    %v358 = vadd.f32 %v341, %v289
    %v359 = vadd.f32 %v342, %v292
    %v360 = vadd.f32 %v343, %v297
    %v361 = vadd.f32 %v344, %v300
    %v362 = vadd.f32 %v345, %v305
    %v363 = vadd.f32 %v346, %v308
    %v364 = vadd.f32 %v347, %v313
    %v365 = vadd.f32 %v348, %v316
    %v366 = vadd.f32 %v349, %v321
    %v367 = vadd.f32 %v350, %v324
    %v368 = vadd.f32 %v351, %v329
    %369 = vst [vmem:[%s334] sm:$0xff] %v352
    %370 = vst [vmem:[%s334 + $0x8] sm:$0xff] %v353
    %371 = vst [vmem:[%s334 + $0x10] sm:$0xff] %v354
    %372 = vst [vmem:[%s334 + $0x18] sm:$0xff] %v355
    %373 = vst [vmem:[%s334 + $0x20] sm:$0xff] %v356
    %374 = vst [vmem:[%s334 + $0x28] sm:$0xff] %v357
    %375 = vst [vmem:[%s334 + $0x30] sm:$0xff] %v358
    %376 = vst [vmem:[%s334 + $0x38] sm:$0xff] %v359
    %377 = vst [vmem:[%s334 + $0x40] sm:$0xff] %v360
    %378 = vst [vmem:[%s334 + $0x48] sm:$0xff] %v361
    %379 = vst [vmem:[%s334 + $0x50] sm:$0xff] %v362
    %380 = vst [vmem:[%s334 + $0x58] sm:$0xff] %v363
    %381 = vst [vmem:[%s334 + $0x60] sm:$0xff] %v364
    %382 = vst [vmem:[%s334 + $0x68] sm:$0xff] %v365
    %383 = vst [vmem:[%s334 + $0x70] sm:$0xff] %v366
    %384 = vst [vmem:[%s334 + $0x78] sm:$0xff] %v367
    %385 = vst [vmem:[%s334 + $0x80] sm:$0xff] %v368
    // Predicated region
    $region22: #{tpu_custom_call.1} parent=1 // pred_check
      _
    $region23: #{tpu_custom_call.1} parent=1 // pred_check_branch
      %387 = sbr.rel (0) target = $region25
    $region24: #{tpu_custom_call.1} parent=1 // pred_region
      %s389 = ssub.s32 2432, 2432
      %390 = vsyncadd [#allocation6], %s389
      %s391 = sshll.u32 [#allocation9], 4
      %s392 = int_to_ptr.vmem [resolvable:$true] %s391
      %397 = dma.vmem_to_hbm [thread:$0]  %s392, 2432, %s3, [#allocation6], 128, 128, 8
    $region25: #{tpu_custom_call.1} parent=1 // pred_fallthru
      _
    // Predicated region
    $region26: #{tpu_custom_call.1} parent=1 // pred_check
      _
    $region27: #{tpu_custom_call.1} parent=1 // pred_check_branch
      %399 = sbr.rel (0) target = $region29
    $region28: #{tpu_custom_call.1} parent=1 // pred_region
      %400 = dma.done [#allocation6], 2432
    $region29: #{tpu_custom_call.1} parent=1 // pred_fallthru
      _
    %401 = vsyncpa [#allocation5], 1
    %402 = vsyncpa [#allocation8], 1
    %403 = vsyncpa [#allocation6], 1

</llo_original>
